<compile_context>
chip_gen: v6e
topology: v6e:2x2x1
jax: 0.10.0
libtpu: 0.0.40
codegen_flags: <defaults>
</compile_context>

<pallas_src>
import jax
import jax.numpy as jnp
from jax import lax
from jax.experimental import pallas as pl
from jax.experimental.pallas import tpu as pltpu

_LANE = 128
_SUBLANE = 8


def _round_up(x: int, m: int) -> int:
    return ((x + m - 1) // m) * m


def _skipgram_kernel(emb_ref, w_tile_ref, out_ref):
    """One (batch-tile, vocab-tile) grid step.

    emb_ref    : VMEM (TB, D_pad)  bf16 -- gathered embeddings (hoisted gather)
    w_tile_ref : VMEM (TN, D_pad)  bf16 -- current V-tile of the tied weight
    out_ref    : VMEM (TB, TN)          -- logits tile
    """
    # Tied projection: (TB, D) @ (TN, D)^T -> (TB, TN) on the MXU,
    # bf16 inputs with f32 accumulation.
    out_ref[...] = lax.dot_general(
        emb_ref[...],
        w_tile_ref[...],
        dimension_numbers=(((1,), (1,)), ((), ())),
        preferred_element_type=jnp.float32,
    ).astype(out_ref.dtype)


def skipgram_forward(x, weight, *, tile_v: int = 2048, tile_b: int = 256,
                     out_dtype=jnp.float32):
    """SkipGram forward.  x: int array (any shape); weight: (V, D) tied weight.

    Returns logits of shape (*x.shape, V) in `out_dtype` (default float32).
    """
    orig_shape = x.shape
    V, D = weight.shape

    # Stream the tied weight in bf16 (no-op if the parameter is already bf16).
    w = weight.astype(jnp.bfloat16)

    # Pad D to a lane multiple (zero columns don't change the dot product).
    D_pad = _round_up(D, _LANE)
    if D_pad != D:
        w = jnp.pad(w, ((0, 0), (0, D_pad - D)))

    # Clamp indices so an out-of-range token can never index OOB.
    x_flat = jnp.clip(x.reshape(-1).astype(jnp.int32), 0, V - 1)
    B = x_flat.shape[0]

    # Batch tile: sublane-aligned, bounded by tile_b.
    TB = _round_up(min(tile_b, _round_up(B, _SUBLANE)), _SUBLANE)
    B_pad = _round_up(B, TB)
    if B_pad != B:
        x_flat = jnp.pad(x_flat, (0, B_pad - B))

    # Vocab tile: large, multiple of 256 (MXU-native on v6e/v7x, 128-granular
    # on v5e), capped so the double-buffered working set stays well inside the
    # smallest (v7x, 64 MiB) VMEM.
    def _working_set(tn):
        return (2 * tn * D_pad * 2          # W tile (double-buffered, bf16)
                + 2 * TB * tn * 4           # out tile (double-buffered, f32 worst case)
                + 2 * TB * D_pad * 2)       # emb tile (double-buffered, bf16)

    TN = min(_round_up(tile_v, 256), _round_up(V, 256))
    budget = 20 * 1024 * 1024
    while TN > 256 and _working_set(TN) > budget:
        TN -= 256

    V_pad = _round_up(V, TN)
    if V_pad != V:
        w = jnp.pad(w, ((0, V_pad - V), (0, 0)))

    # Hoisted embedding gather: XLA's gather is far cheaper than per-row
    # in-kernel DMAs, and it turns emb into a plain (parallel-friendly) input.
    emb = jnp.take(w, x_flat, axis=0)        # (B_pad, D_pad) bf16

    grid = (B_pad // TB, V_pad // TN)
    vmem_limit = min(max(2 * _working_set(TN) + (2 << 20), 32 << 20), 48 << 20)

    grid_spec = pltpu.PrefetchScalarGridSpec(
        num_scalar_prefetch=0,
        grid=grid,
        in_specs=[
            # Gathered embeddings: same block for every V tile of a batch tile,
            # so Pallas keeps it resident across the inner V sweep.
            pl.BlockSpec((TB, D_pad), lambda i, j: (i, 0)),
            # (TN, D_pad) slice of W streamed through VMEM, double-buffered so
            # the HBM DMA overlaps the MXU matmul.
            pl.BlockSpec((TN, D_pad), lambda i, j: (j, 0)),
        ],
        out_specs=pl.BlockSpec((TB, TN), lambda i, j: (i, j)),
    )

    logits = pl.pallas_call(
        _skipgram_kernel,
        out_shape=jax.ShapeDtypeStruct((B_pad, V_pad), out_dtype),
        grid_spec=grid_spec,
        compiler_params=pltpu.CompilerParams(
            # No cross-step state any more: both axes shard across TensorCores
            # on v7x (harmless on single-TC v5e/v6e).
            dimension_semantics=("parallel", "parallel"),
            vmem_limit_bytes=vmem_limit,
        ),
    )(emb, w)

    return logits[:B, :V].reshape(*orig_shape, V)


if __name__ == "__main__":
    # Small, deterministic shapes consistent with the module's __init__.
    num_words = 512   # vocabulary size V
    embed_dim = 100   # embedding dimension D (module default; exercises D->128 padding)
    batch = 8         # number of center-word indices

    key = jax.random.PRNGKey(0)
    k_w, k_x = jax.random.split(key)

    weight = jax.random.normal(k_w, (num_words, embed_dim), dtype=jnp.float32)
    x = jax.random.randint(k_x, (batch,), 0, num_words, dtype=jnp.int32)

    logits = skipgram_forward(x, weight)
    logits = jax.block_until_ready(logits)

    # Pure-JAX reference of the PyTorch forward on the same bf16-quantized
    # parameter the kernel streams.
    w_ref = weight.astype(jnp.bfloat16).astype(jnp.float32)
    ref = lax.dot_general(
        w_ref[x], w_ref,
        dimension_numbers=(((1,), (1,)), ((), ())),
        precision=lax.Precision.HIGHEST,
    )

    assert logits.shape == (batch, num_words)
    assert jnp.allclose(logits, ref, atol=1e-2, rtol=1e-2), float(
        jnp.max(jnp.abs(logits - ref))
    )
    print("KERNEL_OK")
</pallas_src>

<mosaic_0001>
module attributes {stable_mosaic.version = 11 : i64} {
  func.func @_skipgram_kernel(%arg0: i32, %arg1: i32, %arg2: memref<8x128xbf16, #tpu.memory_space<vmem>>, %arg3: memref<512x128xbf16, #tpu.memory_space<vmem>>, %arg4: memref<8x512xf32, #tpu.memory_space<vmem>>) attributes {dimension_semantics = [#tpu.dimension_semantics<parallel>, #tpu.dimension_semantics<parallel>], iteration_bounds = array<i64: 1, 1>, scalar_prefetch = 0 : i64, scratch_operands = 0 : i64, tpu.core_type = #tpu.core_type<tc>, window_params = [{transform_indices = @transform_0, window_bounds = array<i64: 8, 128>}, {transform_indices = @transform_1, window_bounds = array<i64: 512, 128>}, {transform_indices = @transform_2, window_bounds = array<i64: 8, 512>}]} {
    %c0 = arith.constant 0 : index
    %c0_0 = arith.constant 0 : index
    %0 = vector.load %arg2[%c0, %c0_0] : memref<8x128xbf16, #tpu.memory_space<vmem>>, vector<8x128xbf16>
    %c0_1 = arith.constant 0 : index
    %c0_2 = arith.constant 0 : index
    %1 = vector.load %arg3[%c0_1, %c0_2] : memref<512x128xbf16, #tpu.memory_space<vmem>>, vector<512x128xbf16>
    %cst = arith.constant dense<0.000000e+00> : vector<8x512xf32>
    %2 = tpu.matmul %0, %1, %cst {dimension_numbers = #tpu.dot_dimension_numbers<[1], [1], [0], [0], [0, 0, 1, 0], [], []>} : vector<8x128xbf16>, vector<512x128xbf16>, vector<8x512xf32> -> vector<8x512xf32>
    %c0_3 = arith.constant 0 : index
    %c0_4 = arith.constant 0 : index
    %3 = vector.load %arg4[%c0_3, %c0_4] : memref<8x512xf32, #tpu.memory_space<vmem>>, vector<8x512xf32>
    tpu.vector_store %arg4[%c0_3, %c0_4], %2 {strides = array<i32>} : memref<8x512xf32, #tpu.memory_space<vmem>>, vector<8x512xf32>,
    return
  }
  func.func @transform_0(%arg0: i32, %arg1: i32) -> (i32, i32) {
    %c0_i32 = arith.constant 0 : i32
    %c0_i32_0 = arith.constant 0 : i32
    return %arg0, %c0_i32 : i32, i32
  }
  func.func @transform_1(%arg0: i32, %arg1: i32) -> (i32, i32) {
    %c0_i32 = arith.constant 0 : i32
    %c0_i32_0 = arith.constant 0 : i32
    return %arg1, %c0_i32 : i32, i32
  }
  func.func @transform_2(%arg0: i32, %arg1: i32) -> (i32, i32) {
    %c0_i32 = arith.constant 0 : i32
    return %arg0, %arg1 : i32, i32
  }
}

</mosaic_0001>

<llo_original>
// kernel: tpu_custom_call.1
$region0: #{tpu_custom_call.1}
  #allocation0 [shape = 'u32[]', space=smem, size = 0x4, offset = 0x4, fixed_abs, tag = 'smem constant byte address 0x4 - core index']
  #allocation1 [shape = 'u32[144,128]{1,0:T(1,128)}', space=vmem, size = 0x12000, scoped, tag = 'internal scratch']
  %s0 = inlined_call_operand.hbm [shape: bf16[8,128], index: 0, kind: input, shape index: {}]
  %s1 = inlined_call_operand.hbm [shape: bf16[512,128], index: 1, kind: input, shape index: {}]
  %s2 = inlined_call_operand.hbm [shape: f32[8,512], index: 2, kind: output, shape index: {}]
  %s3 = sld [smem:[#allocation0]]
  $region26: #{tpu_custom_call.1} parent=0
    _
  %s5 = ssub.s32 1, %s3
  %s6 = scalar_select 0, %s5, %s3
  $region1: #{tpu_custom_call.1} parent=0
    #allocation2 [shape = 'u8[2048]{0}', space=vmem, size = 0x800, scoped, tag = 'input window, operand 0, single buffered']
    #allocation3 [shape = 's32[1]{0}', space=sflag, size = 0x4, scoped, tag = 'scoped memory for tpu_custom_call.1']
    #allocation4 [shape = 's32[1]{0}', space=sflag, size = 0x4, scoped, tag = 'scoped memory for tpu_custom_call.1']
    #allocation5 [shape = 'u8[131072]{0}', space=vmem, size = 0x20000, scoped, tag = 'input window, operand 1, single buffered']
    #allocation6 [shape = 's32[1]{0}', space=sflag, size = 0x4, scoped, tag = 'scoped memory for tpu_custom_call.1']
    #allocation7 [shape = 'u8[16384]{0}', space=vmem, size = 0x4000, scoped, tag = 'output window, operand 0, single buffered']
    %7 = vsyncpa [#allocation3], 0
    %8 = vsyncpa [#allocation6], 0
    %9 = vsyncpa [#allocation4], 0
    // Predicated region
    $region2: #{tpu_custom_call.1} parent=1 // pred_check
      _
    $region3: #{tpu_custom_call.1} parent=1 // pred_check_branch
      %11 = sbr.rel (0) target = $region5
    $region4: #{tpu_custom_call.1} parent=1 // pred_region
      %s13 = ssub.s32 64, 64
      %14 = vsyncadd [#allocation3], %s13
      %s16 = sshll.u32 [#allocation2], 4
      %s17 = int_to_ptr.vmem [resolvable:$true] %s16
      %19 = dma.hbm_to_vmem [thread:$0]  %s0, 64, %s17, [#allocation3]
    $region5: #{tpu_custom_call.1} parent=1 // pred_fallthru
      _
    // Predicated region
    $region6: #{tpu_custom_call.1} parent=1 // pred_check
      _
    $region7: #{tpu_custom_call.1} parent=1 // pred_check_branch
      %21 = sbr.rel (0) target = $region9
    $region8: #{tpu_custom_call.1} parent=1 // pred_region
      %s23 = ssub.s32 4096, 4096
      %24 = vsyncadd [#allocation6], %s23
      %s25 = sshll.u32 [#allocation5], 4
      %s26 = int_to_ptr.vmem [resolvable:$true] %s25
      %31 = dma.hbm_to_vmem [thread:$0]  %s1, 4096, %s26, [#allocation6], 64, 64, 4
    $region9: #{tpu_custom_call.1} parent=1 // pred_fallthru
      _
    // Predicated region
    $region10: #{tpu_custom_call.1} parent=1 // pred_check
      _
    $region11: #{tpu_custom_call.1} parent=1 // pred_check_branch
      %33 = sbr.rel (0) target = $region13
    $region12: #{tpu_custom_call.1} parent=1 // pred_region
      %34 = dma.done [#allocation3], 64
    $region13: #{tpu_custom_call.1} parent=1 // pred_fallthru
      _
    // Predicated region
    $region14: #{tpu_custom_call.1} parent=1 // pred_check
      _
    $region15: #{tpu_custom_call.1} parent=1 // pred_check_branch
      %36 = sbr.rel (0) target = $region17
    $region16: #{tpu_custom_call.1} parent=1 // pred_region
      %37 = dma.done [#allocation6], 4096
    $region17: #{tpu_custom_call.1} parent=1 // pred_fallthru
      _
    %v39 = vld [vmem:[#allocation2] sm:$0xf]
    %v40 = vld [vmem:[#allocation5] sm:$0xf]
    %v41 = vld [vmem:[#allocation5 + $0x4] sm:$0xf]
    %v42 = vld [vmem:[#allocation5 + $0x8] sm:$0xf]
    %v43 = vld [vmem:[#allocation5 + $0xc] sm:$0xf]
    %v44 = vld [vmem:[#allocation5 + $0x10] sm:$0xf]
    %v45 = vld [vmem:[#allocation5 + $0x14] sm:$0xf]
    %v46 = vld [vmem:[#allocation5 + $0x18] sm:$0xf]
    %v47 = vld [vmem:[#allocation5 + $0x1c] sm:$0xf]
    %v48 = vld [vmem:[#allocation5 + $0x20] sm:$0xf]
    %v49 = vld [vmem:[#allocation5 + $0x24] sm:$0xf]
    %v50 = vld [vmem:[#allocation5 + $0x28] sm:$0xf]
    %v51 = vld [vmem:[#allocation5 + $0x2c] sm:$0xf]
    %v52 = vld [vmem:[#allocation5 + $0x30] sm:$0xf]
    %v53 = vld [vmem:[#allocation5 + $0x34] sm:$0xf]
    %v54 = vld [vmem:[#allocation5 + $0x38] sm:$0xf]
    %v55 = vld [vmem:[#allocation5 + $0x3c] sm:$0xf]
    %v56 = vld [vmem:[#allocation5 + $0x40] sm:$0xf]
    %v57 = vld [vmem:[#allocation5 + $0x44] sm:$0xf]
    %v58 = vld [vmem:[#allocation5 + $0x48] sm:$0xf]
    %v59 = vld [vmem:[#allocation5 + $0x4c] sm:$0xf]
    %v60 = vld [vmem:[#allocation5 + $0x50] sm:$0xf]
    %v61 = vld [vmem:[#allocation5 + $0x54] sm:$0xf]
    %v62 = vld [vmem:[#allocation5 + $0x58] sm:$0xf]
    %v63 = vld [vmem:[#allocation5 + $0x5c] sm:$0xf]
    %v64 = vld [vmem:[#allocation5 + $0x60] sm:$0xf]
    %v65 = vld [vmem:[#allocation5 + $0x64] sm:$0xf]
    %v66 = vld [vmem:[#allocation5 + $0x68] sm:$0xf]
    %v67 = vld [vmem:[#allocation5 + $0x6c] sm:$0xf]
    %v68 = vld [vmem:[#allocation5 + $0x70] sm:$0xf]
    %v69 = vld [vmem:[#allocation5 + $0x74] sm:$0xf]
    %v70 = vld [vmem:[#allocation5 + $0x78] sm:$0xf]
    %v71 = vld [vmem:[#allocation5 + $0x7c] sm:$0xf]
    %v72 = vld [vmem:[#allocation5 + $0x80] sm:$0xf]
    %v73 = vld [vmem:[#allocation5 + $0x84] sm:$0xf]
    %v74 = vld [vmem:[#allocation5 + $0x88] sm:$0xf]
    %v75 = vld [vmem:[#allocation5 + $0x8c] sm:$0xf]
    %v76 = vld [vmem:[#allocation5 + $0x90] sm:$0xf]
    %v77 = vld [vmem:[#allocation5 + $0x94] sm:$0xf]
    %v78 = vld [vmem:[#allocation5 + $0x98] sm:$0xf]
    %v79 = vld [vmem:[#allocation5 + $0x9c] sm:$0xf]
    %v80 = vld [vmem:[#allocation5 + $0xa0] sm:$0xf]
    %v81 = vld [vmem:[#allocation5 + $0xa4] sm:$0xf]
    %v82 = vld [vmem:[#allocation5 + $0xa8] sm:$0xf]
    %v83 = vld [vmem:[#allocation5 + $0xac] sm:$0xf]
    %v84 = vld [vmem:[#allocation5 + $0xb0] sm:$0xf]
    %v85 = vld [vmem:[#allocation5 + $0xb4] sm:$0xf]
    %v86 = vld [vmem:[#allocation5 + $0xb8] sm:$0xf]
    %v87 = vld [vmem:[#allocation5 + $0xbc] sm:$0xf]
    %v88 = vld [vmem:[#allocation5 + $0xc0] sm:$0xf]
    %v89 = vld [vmem:[#allocation5 + $0xc4] sm:$0xf]
    %v90 = vld [vmem:[#allocation5 + $0xc8] sm:$0xf]
    %v91 = vld [vmem:[#allocation5 + $0xcc] sm:$0xf]
    %v92 = vld [vmem:[#allocation5 + $0xd0] sm:$0xf]
    %v93 = vld [vmem:[#allocation5 + $0xd4] sm:$0xf]
    %v94 = vld [vmem:[#allocation5 + $0xd8] sm:$0xf]
    %v95 = vld [vmem:[#allocation5 + $0xdc] sm:$0xf]
    %v96 = vld [vmem:[#allocation5 + $0xe0] sm:$0xf]
    %v97 = vld [vmem:[#allocation5 + $0xe4] sm:$0xf]
    %v98 = vld [vmem:[#allocation5 + $0xe8] sm:$0xf]
    %v99 = vld [vmem:[#allocation5 + $0xec] sm:$0xf]
    %v100 = vld [vmem:[#allocation5 + $0xf0] sm:$0xf]
    %v101 = vld [vmem:[#allocation5 + $0xf4] sm:$0xf]
    %v102 = vld [vmem:[#allocation5 + $0xf8] sm:$0xf]
    %v103 = vld [vmem:[#allocation5 + $0xfc] sm:$0xf]
    %v168 = vunpack.c.l.b16 %v40
    %v169 = vunpack.c.l.b16 %v41
    %v170 = vunpack.c.l.b16 %v42
    %v171 = vunpack.c.l.b16 %v43
    %v172 = vunpack.c.l.b16 %v44
    %v173 = vunpack.c.l.b16 %v45
    %v174 = vunpack.c.l.b16 %v46
    %v175 = vunpack.c.l.b16 %v47
    %v176 = vunpack.c.l.b16 %v48
    %v177 = vunpack.c.l.b16 %v49
    %v178 = vunpack.c.l.b16 %v50
    %v179 = vunpack.c.l.b16 %v51
    %v180 = vunpack.c.l.b16 %v52
    %v181 = vunpack.c.l.b16 %v53
    %v182 = vunpack.c.l.b16 %v54
    %v183 = vunpack.c.l.b16 %v55
    %v184 = vunpack.c.l.b16 %v56
    %v185 = vunpack.c.l.b16 %v57
    %v186 = vunpack.c.l.b16 %v58
    %v187 = vunpack.c.l.b16 %v59
    %v188 = vunpack.c.l.b16 %v60
    %v189 = vunpack.c.l.b16 %v61
    %v190 = vunpack.c.l.b16 %v62
    %v191 = vunpack.c.l.b16 %v63
    %v192 = vunpack.c.l.b16 %v64
    %v193 = vunpack.c.l.b16 %v65
    %v194 = vunpack.c.l.b16 %v66
    %v195 = vunpack.c.l.b16 %v67
    %v196 = vunpack.c.l.b16 %v68
    %v197 = vunpack.c.l.b16 %v69
    %v198 = vunpack.c.l.b16 %v70
    %v199 = vunpack.c.l.b16 %v71
    %v200 = vunpack.c.l.b16 %v72
    %v201 = vunpack.c.l.b16 %v73
    %v202 = vunpack.c.l.b16 %v74
    %v203 = vunpack.c.l.b16 %v75
    %v204 = vunpack.c.l.b16 %v76
    %v205 = vunpack.c.l.b16 %v77
    %v206 = vunpack.c.l.b16 %v78
    %v207 = vunpack.c.l.b16 %v79
    %v208 = vunpack.c.l.b16 %v80
    %v209 = vunpack.c.l.b16 %v81
    %v210 = vunpack.c.l.b16 %v82
    %v211 = vunpack.c.l.b16 %v83
    %v212 = vunpack.c.l.b16 %v84
    %v213 = vunpack.c.l.b16 %v85
    %v214 = vunpack.c.l.b16 %v86
    %v215 = vunpack.c.l.b16 %v87
    %v216 = vunpack.c.l.b16 %v88
    %v217 = vunpack.c.l.b16 %v89
    %v218 = vunpack.c.l.b16 %v90
    %v219 = vunpack.c.l.b16 %v91
    %v220 = vunpack.c.l.b16 %v92
    %v221 = vunpack.c.l.b16 %v93
    %v222 = vunpack.c.l.b16 %v94
    %v223 = vunpack.c.l.b16 %v95
    %v224 = vunpack.c.l.b16 %v96
    %v225 = vunpack.c.l.b16 %v97
    %v226 = vunpack.c.l.b16 %v98
    %v227 = vunpack.c.l.b16 %v99
    %v228 = vunpack.c.l.b16 %v100
    %v229 = vunpack.c.l.b16 %v101
    %v230 = vunpack.c.l.b16 %v102
    %v231 = vunpack.c.l.b16 %v103
    %v232 = vpack.c.b16 %v169, %v168
    %v233 = vpack.c.b16 %v171, %v170
    %v234 = vpack.c.b16 %v173, %v172
    %v235 = vpack.c.b16 %v175, %v174
    %v236 = vpack.c.b16 %v177, %v176
    %v237 = vpack.c.b16 %v179, %v178
    %v238 = vpack.c.b16 %v181, %v180
    %v239 = vpack.c.b16 %v183, %v182
    %v240 = vpack.c.b16 %v185, %v184
    %v241 = vpack.c.b16 %v187, %v186
    %v242 = vpack.c.b16 %v189, %v188
    %v243 = vpack.c.b16 %v191, %v190
    %v244 = vpack.c.b16 %v193, %v192
    %v245 = vpack.c.b16 %v195, %v194
    %v246 = vpack.c.b16 %v197, %v196
    %v247 = vpack.c.b16 %v199, %v198
    %v248 = vpack.c.b16 %v201, %v200
    %v249 = vpack.c.b16 %v203, %v202
    %v250 = vpack.c.b16 %v205, %v204
    %v251 = vpack.c.b16 %v207, %v206
    %v252 = vpack.c.b16 %v209, %v208
    %v253 = vpack.c.b16 %v211, %v210
    %v254 = vpack.c.b16 %v213, %v212
    %v255 = vpack.c.b16 %v215, %v214
    %v256 = vpack.c.b16 %v217, %v216
    %v257 = vpack.c.b16 %v219, %v218
    %v258 = vpack.c.b16 %v221, %v220
    %v259 = vpack.c.b16 %v223, %v222
    %v260 = vpack.c.b16 %v225, %v224
    %v261 = vpack.c.b16 %v227, %v226
    %v262 = vpack.c.b16 %v229, %v228
    %v263 = vpack.c.b16 %v231, %v230
    %296 = vmatprep.subr.bf16.mxu0 0
    %297 = vmatpush1.bf16.xpose.msra.mxu0 %v239
    %298 = vmatprep.subr.bf16.mxu0 0
    %299 = vmatpush1.bf16.xpose.msra.mxu0 %v238
    %300 = vmatprep.subr.bf16.mxu0 0
    %301 = vmatpush1.bf16.xpose.msra.mxu0 %v237
    %302 = vmatprep.subr.bf16.mxu0 0
    %303 = vmatpush1.bf16.xpose.msra.mxu0 %v236
    %304 = vmatprep.subr.bf16.mxu0 0
    %305 = vmatpush1.bf16.xpose.msra.mxu0 %v235
    %306 = vmatprep.subr.bf16.mxu0 0
    %307 = vmatpush1.bf16.xpose.msra.mxu0 %v234
    %308 = vmatprep.subr.bf16.mxu0 0
    %309 = vmatpush1.bf16.xpose.msra.mxu0 %v233
    %310 = vmatprep.subr.bf16.mxu0 0
    %311 = vmatpush1.bf16.xpose.msra.mxu0 %v232
    %312 = vmatprep.subr.bf16.mxu0 0
    %313 = vmatpush2.bf16.xpose.msra.mxu0 %v247
    %314 = vmatprep.subr.bf16.mxu0 0
    %315 = vmatpush2.bf16.xpose.msra.mxu0 %v246
    %316 = vmatprep.subr.bf16.mxu0 0
    %317 = vmatpush2.bf16.xpose.msra.mxu0 %v245
    %318 = vmatprep.subr.bf16.mxu0 0
    %319 = vmatpush2.bf16.xpose.msra.mxu0 %v244
    %320 = vmatprep.subr.bf16.mxu0 0
    %321 = vmatpush2.bf16.xpose.msra.mxu0 %v243
    %322 = vmatprep.subr.bf16.mxu0 0
    %323 = vmatpush2.bf16.xpose.msra.mxu0 %v242
    %324 = vmatprep.subr.bf16.mxu0 0
    %325 = vmatpush2.bf16.xpose.msra.mxu0 %v241
    %326 = vmatprep.subr.bf16.mxu0 0
    %327 = vmatpush2.bf16.xpose.msra.mxu0 %v240
    %328 = vmatprep.mubr.bf16.mxu0 0
    %329 = vmatmul.mubr.bf16.gmra.mxu0 %v39
    %v330 = vpop.f32.mrf.mxu0
    %v331 = vadd.f32 0.0, %v330
    %v332 = vpop.f32.mrf.mxu0
    %v333 = vadd.f32 0.0, %v332
    %v334 = vpop.f32.mrf.mxu0
    %v335 = vpop.f32.mrf.mxu0
    %336 = vdwg.mxu0
    %337 = vmatprep.subr.bf16.mxu0 0
    %338 = vmatpush1.bf16.xpose.msra.mxu0 %v255
    %339 = vmatprep.subr.bf16.mxu0 0
    %340 = vmatpush1.bf16.xpose.msra.mxu0 %v254
    %341 = vmatprep.subr.bf16.mxu0 0
    %342 = vmatpush1.bf16.xpose.msra.mxu0 %v253
    %343 = vmatprep.subr.bf16.mxu0 0
    %344 = vmatpush1.bf16.xpose.msra.mxu0 %v252
    %345 = vmatprep.subr.bf16.mxu0 0
    %346 = vmatpush1.bf16.xpose.msra.mxu0 %v251
    %347 = vmatprep.subr.bf16.mxu0 0
    %348 = vmatpush1.bf16.xpose.msra.mxu0 %v250
    %349 = vmatprep.subr.bf16.mxu0 0
    %350 = vmatpush1.bf16.xpose.msra.mxu0 %v249
    %351 = vmatprep.subr.bf16.mxu0 0
    %352 = vmatpush1.bf16.xpose.msra.mxu0 %v248
    %353 = vmatprep.subr.bf16.mxu0 0
    %354 = vmatpush2.bf16.xpose.msra.mxu0 %v263
    %355 = vmatprep.subr.bf16.mxu0 0
    %356 = vmatpush2.bf16.xpose.msra.mxu0 %v262
    %357 = vmatprep.subr.bf16.mxu0 0
    %358 = vmatpush2.bf16.xpose.msra.mxu0 %v261
    %359 = vmatprep.subr.bf16.mxu0 0
    %360 = vmatpush2.bf16.xpose.msra.mxu0 %v260
    %361 = vmatprep.subr.bf16.mxu0 0
    %362 = vmatpush2.bf16.xpose.msra.mxu0 %v259
    %363 = vmatprep.subr.bf16.mxu0 0
    %364 = vmatpush2.bf16.xpose.msra.mxu0 %v258
    %365 = vmatprep.subr.bf16.mxu0 0
    %366 = vmatpush2.bf16.xpose.msra.mxu0 %v257
    %367 = vmatprep.subr.bf16.mxu0 0
    %368 = vmatpush2.bf16.xpose.msra.mxu0 %v256
    %369 = vmatprep.mubr.bf16.mxu0 0
    %370 = vmatmul.mubr.bf16.gmra.mxu0 %v39
    %v371 = vpop.f32.mrf.mxu0
    %v372 = vadd.f32 0.0, %v371
    %v373 = vpop.f32.mrf.mxu0
    %v374 = vadd.f32 0.0, %v373
    %v375 = vpop.f32.mrf.mxu0
    %v376 = vpop.f32.mrf.mxu0
    %377 = vdwg.mxu0
    %378 = vst [vmem:[#allocation7] sm:$0xff] %v331
    %379 = vst [vmem:[#allocation7 + $0x8] sm:$0xff] %v333
    %380 = vst [vmem:[#allocation7 + $0x10] sm:$0xff] %v372
    %381 = vst [vmem:[#allocation7 + $0x18] sm:$0xff] %v374
    // Predicated region
    $region18: #{tpu_custom_call.1} parent=1 // pred_check
      _
    $region19: #{tpu_custom_call.1} parent=1 // pred_check_branch
      %383 = sbr.rel (0) target = $region21
    $region20: #{tpu_custom_call.1} parent=1 // pred_region
      %s385 = ssub.s32 512, 512
      %386 = vsyncadd [#allocation4], %s385
      %s388 = sshll.u32 [#allocation7], 4
      %s389 = int_to_ptr.vmem [resolvable:$true] %s388
      %391 = dma.vmem_to_hbm [thread:$0]  %s389, 512, %s2, [#allocation4]
    $region21: #{tpu_custom_call.1} parent=1 // pred_fallthru
      _
    // Predicated region
    $region22: #{tpu_custom_call.1} parent=1 // pred_check
      _
    $region23: #{tpu_custom_call.1} parent=1 // pred_check_branch
      %393 = sbr.rel (0) target = $region25
    $region24: #{tpu_custom_call.1} parent=1 // pred_region
      %394 = dma.done [#allocation4], 512
    $region25: #{tpu_custom_call.1} parent=1 // pred_fallthru
      _
    %395 = vsyncpa [#allocation3], 1
    %396 = vsyncpa [#allocation6], 1
    %397 = vsyncpa [#allocation4], 1

</llo_original>
